<compile_context>
chip_gen: v6e
topology: v6e:2x2x1
jax: 0.10.0
libtpu: 0.0.40
codegen_flags: <defaults>
</compile_context>

<pallas_src>
import functools

import jax
import jax.numpy as jnp
from jax import lax
from jax.experimental import pallas as pl
from jax.experimental.pallas import tpu as pltpu

LANE = 128
TM_MAX = 8192                       # rows per grid step: (8192,128) f32 = 4 MiB block
VMEM_LIMIT_BYTES = 32 * 1024 * 1024  # 2 inputs x 2 buffers x 4 MiB = 16 MiB + headroom


def _tensorcores_per_chip():
    """2 TensorCores per chip on v4 / v5p / v7x; 1 on v5e / v6e."""
    try:
        kind = jax.devices()[0].device_kind.lower()
    except Exception:
        return 1
    if "lite" in kind or "v5e" in kind or "v6e" in kind:
        return 1
    if "v4" in kind or "v5p" in kind or "7" in kind:
        return 2
    return 1


def _l1_kernel(o_ref, t_ref, out_ref, acc_ref, *, tm, rows, steps_per_core,
               needs_mask):
    i = pl.program_id(1)

    @pl.when(i == 0)
    def _():
        acc_ref[...] = jnp.zeros_like(acc_ref)

    # Hot loop: cast -> sub -> abs (VPU only); accumulate in f32.
    d = jnp.abs(o_ref[...].astype(jnp.float32) - t_ref[...].astype(jnp.float32))

    if needs_mask:
        # Logical (unclamped) step index.  Over-coverage steps (whose DMA was
        # clamped to the last real block) get base_row >= rows and are fully
        # masked, contributing exactly zero.
        base_row = (pl.program_id(0) * steps_per_core + i) * tm
        is_boundary = base_row + tm > rows

        @pl.when(jnp.logical_not(is_boundary))
        def _():
            acc_ref[...] += d.reshape(tm // 8, 8, LANE).sum(axis=0)

        @pl.when(is_boundary)
        def _():
            row = base_row + lax.broadcasted_iota(jnp.int32, (tm, LANE), 0)
            dm = jnp.where(row < rows, d, 0.0)
            acc_ref[...] += dm.reshape(tm // 8, 8, LANE).sum(axis=0)
    else:
        acc_ref[...] += d.reshape(tm // 8, 8, LANE).sum(axis=0)

    @pl.when(i == pl.num_programs(1) - 1)
    def _():
        # Lane-dense (1, 128) partial; final cross-lane reduce is done in the
        # wrapper on the tiny partials array.
        out_ref[...] = acc_ref[...].sum(axis=0, keepdims=True)


def l1_loss(output, target):
    assert output.shape == target.shape, "output/target shapes must match"
    n = output.size
    o_flat = output.reshape(-1)
    t_flat = target.reshape(-1)

    # TODO(synk): rare n % 128 != 0 path still zero-pads (extra HBM copy);
    # could be replaced by in-kernel lane masking of the final partial row.
    if n % LANE != 0:
        pad = LANE - (n % LANE)
        o_flat = jnp.pad(o_flat, (0, pad))
        t_flat = jnp.pad(t_flat, (0, pad))
    rows = o_flat.size // LANE
    o2d = o_flat.reshape(rows, LANE)
    t2d = t_flat.reshape(rows, LANE)

    # Round the block rows up to the dtype's sublane packing (8 f32 / 16 bf16
    # / 32 int8-fp8) so small inputs still meet the packed min tile.
    itemsize = jnp.dtype(output.dtype).itemsize
    pack = max(8, 8 * (4 // max(itemsize, 1)))
    tm = min(TM_MAX, pl.cdiv(rows, pack) * pack)
    steps = pl.cdiv(rows, tm)

    num_cores = _tensorcores_per_chip()
    if steps < num_cores:
        num_cores = 1
    steps_per_core = pl.cdiv(steps, num_cores)
    needs_mask = (num_cores * steps_per_core * tm) != rows

    kernel = functools.partial(
        _l1_kernel, tm=tm, rows=rows, steps_per_core=steps_per_core,
        needs_mask=needs_mask)

    # Clamp the block index so an over-covering grid step cheaply re-reads the
    # last real block instead of DMA-ing past the end of the array.
    last_block = steps - 1

    def in_map(c, i):
        return (jnp.minimum(c * steps_per_core + i, last_block), 0)

    cost = pl.CostEstimate(flops=3 * n, transcendentals=0,
                           bytes_accessed=2 * n * itemsize + num_cores * LANE * 4)

    def run(leading_sem):
        return pl.pallas_call(
            kernel,
            out_shape=jax.ShapeDtypeStruct((num_cores, LANE), jnp.float32),
            grid_spec=pltpu.PrefetchScalarGridSpec(
                num_scalar_prefetch=0,
                grid=(num_cores, steps_per_core),
                in_specs=[
                    pl.BlockSpec((tm, LANE), in_map),
                    pl.BlockSpec((tm, LANE), in_map),
                ],
                out_specs=pl.BlockSpec((1, LANE), lambda c, i: (c, 0)),
                scratch_shapes=[pltpu.VMEM((8, LANE), jnp.float32)],
            ),
            compiler_params=pltpu.CompilerParams(
                dimension_semantics=(leading_sem, "arbitrary"),
                vmem_limit_bytes=VMEM_LIMIT_BYTES,
            ),
            cost_estimate=cost,
        )(o2d, t2d)

    if num_cores > 1:
        # Prefer explicit core-parallel sharding across the 2 TensorCores;
        # fall back to megacore "parallel" semantics if unsupported.
        try:
            partials = run(pltpu.CORE_PARALLEL)
        except Exception:
            partials = run("parallel")
    else:
        partials = run("arbitrary")

    # Combine per-core lane partials and apply the mean normalization.
    return jnp.sum(partials) / jnp.float32(n)


if __name__ == "__main__":
    key = jax.random.PRNGKey(0)
    k1, k2 = jax.random.split(key)
    # NCHW inputs, same as the PyTorch module would receive.
    x_shape = (2, 4, 16, 16)
    output = jax.random.normal(k1, x_shape, dtype=jnp.float32)
    target = jax.random.normal(k2, x_shape, dtype=jnp.float32)

    loss = l1_loss(output, target)
    jax.block_until_ready(loss)

    # Correctness check against pure-JAX reference.
    ref = jnp.mean(jnp.abs(output - target))
    assert jnp.allclose(loss, ref, rtol=1e-6, atol=1e-6), (loss, ref)
    print("KERNEL_OK")
</pallas_src>

<mosaic_0001>
module attributes {stable_mosaic.version = 11 : i64} {
  func.func @_l1_kernel(%arg0: i32, %arg1: i32, %arg2: memref<16x128xf32, #tpu.memory_space<vmem>>, %arg3: memref<16x128xf32, #tpu.memory_space<vmem>>, %arg4: memref<1x128xf32, #tpu.memory_space<vmem>>, %arg5: memref<8x128xf32, #tpu.memory_space<vmem>>) attributes {dimension_semantics = [#tpu.dimension_semantics<arbitrary>, #tpu.dimension_semantics<arbitrary>], iteration_bounds = array<i64: 1, 1>, scalar_prefetch = 0 : i64, scratch_operands = 1 : i64, tpu.core_type = #tpu.core_type<tc>, window_params = [{transform_indices = @transform_0, window_bounds = array<i64: 16, 128>}, {transform_indices = @transform_1, window_bounds = array<i64: 16, 128>}, {transform_indices = @transform_2, window_bounds = array<i64: 1, 128>}]} {
    %c0_i32 = arith.constant 0 : i32
    %0 = arith.cmpi eq, %arg1, %c0_i32 : i32
    %1 = arith.extui %0 : i1 to i32
    %c0_i32_0 = arith.constant 0 : i32
    %2 = arith.cmpi ne, %1, %c0_i32_0 : i32
    scf.if %2 {
      %cst_10 = arith.constant 0.000000e+00 : f32
      %15 = vector.broadcast %cst_10 : f32 to vector<8x128xf32>
      %c0_11 = arith.constant 0 : index
      %c0_12 = arith.constant 0 : index
      %16 = vector.load %arg5[%c0_11, %c0_12] : memref<8x128xf32, #tpu.memory_space<vmem>>, vector<8x128xf32>
      tpu.vector_store %arg5[%c0_11, %c0_12], %15 {strides = array<i32>} : memref<8x128xf32, #tpu.memory_space<vmem>>, vector<8x128xf32>,
    } else {
    }
    %c0 = arith.constant 0 : index
    %c0_1 = arith.constant 0 : index
    %3 = vector.load %arg2[%c0, %c0_1] : memref<16x128xf32, #tpu.memory_space<vmem>>, vector<16x128xf32>
    %c0_2 = arith.constant 0 : index
    %c0_3 = arith.constant 0 : index
    %4 = vector.load %arg3[%c0_2, %c0_3] : memref<16x128xf32, #tpu.memory_space<vmem>>, vector<16x128xf32>
    %5 = arith.subf %3, %4 : vector<16x128xf32>
    %6 = math.absf %5 : vector<16x128xf32>
    %c0_4 = arith.constant 0 : index
    %c0_5 = arith.constant 0 : index
    %7 = vector.load %arg5[%c0_4, %c0_5] : memref<8x128xf32, #tpu.memory_space<vmem>>, vector<8x128xf32>
    %8 = vector.shape_cast %6 : vector<16x128xf32> to vector<2x8x128xf32>
    %cst = arith.constant dense<0.000000e+00> : vector<8x128xf32>
    %9 = vector.multi_reduction <add>, %8, %cst [0] : vector<2x8x128xf32> to vector<8x128xf32>
    %10 = arith.addf %7, %9 : vector<8x128xf32>
    %c0_6 = arith.constant 0 : index
    %c0_7 = arith.constant 0 : index
    %11 = vector.load %arg5[%c0_6, %c0_7] : memref<8x128xf32, #tpu.memory_space<vmem>>, vector<8x128xf32>
    tpu.vector_store %arg5[%c0_6, %c0_7], %10 {strides = array<i32>} : memref<8x128xf32, #tpu.memory_space<vmem>>, vector<8x128xf32>,
    %c0_i32_8 = arith.constant 0 : i32
    %12 = arith.cmpi eq, %arg1, %c0_i32_8 : i32
    %13 = arith.extui %12 : i1 to i32
    %c0_i32_9 = arith.constant 0 : i32
    %14 = arith.cmpi ne, %13, %c0_i32_9 : i32
    scf.if %14 {
      %c0_10 = arith.constant 0 : index
      %c0_11 = arith.constant 0 : index
      %15 = vector.load %arg5[%c0_10, %c0_11] : memref<8x128xf32, #tpu.memory_space<vmem>>, vector<8x128xf32>
      %cst_12 = arith.constant dense<0.000000e+00> : vector<128xf32>
      %16 = vector.multi_reduction <add>, %15, %cst_12 [0] : vector<8x128xf32> to vector<128xf32>
      %17 = vector.shape_cast %16 : vector<128xf32> to vector<1x128xf32>
      %c0_13 = arith.constant 0 : index
      %c0_14 = arith.constant 0 : index
      %18 = vector.load %arg4[%c0_13, %c0_14] : memref<1x128xf32, #tpu.memory_space<vmem>>, vector<1x128xf32>
      tpu.vector_store %arg4[%c0_13, %c0_14], %17 {strides = array<i32>} : memref<1x128xf32, #tpu.memory_space<vmem>>, vector<1x128xf32>,
    } else {
    }
    return
  }
  func.func @transform_0(%arg0: i32, %arg1: i32) -> (i32, i32) {
    %c1_i32 = arith.constant 1 : i32
    %0 = arith.muli %arg0, %c1_i32 : i32
    %1 = arith.addi %0, %arg1 : i32
    %c0_i32 = arith.constant 0 : i32
    %2 = arith.minsi %1, %c0_i32 : i32
    %c0_i32_0 = arith.constant 0 : i32
    %c0_i32_1 = arith.constant 0 : i32
    return %2, %c0_i32_0 : i32, i32
  }
  func.func @transform_1(%arg0: i32, %arg1: i32) -> (i32, i32) {
    %c1_i32 = arith.constant 1 : i32
    %0 = arith.muli %arg0, %c1_i32 : i32
    %1 = arith.addi %0, %arg1 : i32
    %c0_i32 = arith.constant 0 : i32
    %2 = arith.minsi %1, %c0_i32 : i32
    %c0_i32_0 = arith.constant 0 : i32
    %c0_i32_1 = arith.constant 0 : i32
    return %2, %c0_i32_0 : i32, i32
  }
  func.func @transform_2(%arg0: i32, %arg1: i32) -> (i32, i32) {
    %c0_i32 = arith.constant 0 : i32
    %c0_i32_0 = arith.constant 0 : i32
    return %arg0, %c0_i32 : i32, i32
  }
}

</mosaic_0001>

<llo_original>
// kernel: tpu_custom_call.1
$region0: #{tpu_custom_call.1}
  #allocation0 [shape = 'u32[]', space=smem, size = 0x4, offset = 0x4, fixed_abs, tag = 'smem constant byte address 0x4 - core index']
  #allocation1 [shape = 'u32[144,128]{1,0:T(1,128)}', space=vmem, size = 0x12000, scoped, tag = 'internal scratch']
  #allocation2 [shape = 'f32[8,128]{1,0:T(8,128)}', space=vmem, size = 0x1000, scoped, tag = 'scratch operand']
  %s0 = inlined_call_operand.hbm [shape: f32[16,128], index: 0, kind: input, shape index: {}]
  %s1 = inlined_call_operand.hbm [shape: f32[16,128], index: 1, kind: input, shape index: {}]
  %s2 = inlined_call_operand.hbm [shape: f32[1,128], index: 2, kind: output, shape index: {}]
  %s3 = sld [smem:[#allocation0]]
  $region34: #{tpu_custom_call.1} parent=0
    _
  %s5 = ssub.s32 1, %s3
  %s6 = scalar_select 0, %s5, %s3
  $region1: #{tpu_custom_call.1} parent=0
    #allocation3 [shape = 'u8[8192]{0}', space=vmem, size = 0x2000, scoped, tag = 'input window, operand 0, single buffered']
    #allocation4 [shape = 's32[1]{0}', space=sflag, size = 0x4, scoped, tag = 'scoped memory for tpu_custom_call.1']
    #allocation5 [shape = 's32[1]{0}', space=sflag, size = 0x4, scoped, tag = 'scoped memory for tpu_custom_call.1']
    #allocation6 [shape = 'u8[8192]{0}', space=vmem, size = 0x2000, scoped, tag = 'input window, operand 1, single buffered']
    #allocation7 [shape = 's32[1]{0}', space=sflag, size = 0x4, scoped, tag = 'scoped memory for tpu_custom_call.1']
    #allocation8 [shape = 'u8[512]{0}', space=vmem, size = 0x400, scoped, tag = 'output window, operand 0, single buffered']
    %7 = vsyncpa [#allocation4], 0
    %8 = vsyncpa [#allocation7], 0
    %9 = vsyncpa [#allocation5], 0
    // Predicated region
    $region2: #{tpu_custom_call.1} parent=1 // pred_check
      _
    $region3: #{tpu_custom_call.1} parent=1 // pred_check_branch
      %11 = sbr.rel (0) target = $region5
    $region4: #{tpu_custom_call.1} parent=1 // pred_region
      %s12 = sadd.s32 0, 0
      %p13 = scmp.lt.s32.totalorder %s12, 0
      %s14 = scalar_select %p13, %s12, 0
      %s15 = smul.u32 2, %s14
      %s17 = ssub.s32 256, 256
      %18 = vsyncadd [#allocation4], %s17
      %s19 = smul.addr %s15, 128
      %s20 = scalar_lea.hbm %s0, %s19
      %s21 = sshll.u32 [#allocation3], 4
      %s22 = int_to_ptr.vmem [resolvable:$true] %s21
      %27 = dma.hbm_to_vmem [thread:$0]  %s20, 256, %s22, [#allocation4], 128, 128, 8
    $region5: #{tpu_custom_call.1} parent=1 // pred_fallthru
      _
    // Predicated region
    $region6: #{tpu_custom_call.1} parent=1 // pred_check
      _
    $region7: #{tpu_custom_call.1} parent=1 // pred_check_branch
      %29 = sbr.rel (0) target = $region9
    $region8: #{tpu_custom_call.1} parent=1 // pred_region
      %s30 = sadd.s32 0, 0
      %p31 = scmp.lt.s32.totalorder %s30, 0
      %s32 = scalar_select %p31, %s30, 0
      %s33 = smul.u32 2, %s32
      %s35 = ssub.s32 256, 256
      %36 = vsyncadd [#allocation7], %s35
      %s37 = smul.addr %s33, 128
      %s38 = scalar_lea.hbm %s1, %s37
      %s39 = sshll.u32 [#allocation6], 4
      %s40 = int_to_ptr.vmem [resolvable:$true] %s39
      %45 = dma.hbm_to_vmem [thread:$0]  %s38, 256, %s40, [#allocation7], 128, 128, 8
    $region9: #{tpu_custom_call.1} parent=1 // pred_fallthru
      _
    // Predicated region
    $region10: #{tpu_custom_call.1} parent=1 // pred_check
      _
    $region11: #{tpu_custom_call.1} parent=1 // pred_check_branch
      %47 = sbr.rel (0) target = $region13
    $region12: #{tpu_custom_call.1} parent=1 // pred_region
      %48 = dma.done [#allocation4], 256
    $region13: #{tpu_custom_call.1} parent=1 // pred_fallthru
      _
    // Predicated region
    $region14: #{tpu_custom_call.1} parent=1 // pred_check
      _
    $region15: #{tpu_custom_call.1} parent=1 // pred_check_branch
      %50 = sbr.rel (0) target = $region17
    $region16: #{tpu_custom_call.1} parent=1 // pred_region
      %51 = dma.done [#allocation7], 256
    $region17: #{tpu_custom_call.1} parent=1 // pred_fallthru
      _
    %s52 = sadd.s32 0, 0
    %p53 = scmp.lt.s32.totalorder %s52, 0
    %s54 = scalar_select %p53, %s52, 0
    %s55 = smul.u32 2, %s54
    %s56 = sadd.s32 0, 0
    %p57 = scmp.lt.s32.totalorder %s56, 0
    %s58 = scalar_select %p57, %s56, 0
    %s59 = smul.u32 2, %s58
    %p60 = scmp.eq.s32.totalorder 0, 0
    // Predicated region
    $region18: #{tpu_custom_call.1} parent=1 // pred_check
      %p61 = pneg %p60
    $region19: #{tpu_custom_call.1} parent=1 // pred_check_branch
      %63 = sbr.rel (%p61) target = $region21
    $region20: #{tpu_custom_call.1} parent=1 // pred_region
      %64 = vst [vmem:[#allocation2] sm:$0xff] 0.0
    $region21: #{tpu_custom_call.1} parent=1 // pred_fallthru
      _
    %v65 = vld [vmem:[#allocation3] sm:$0xff]
    %v66 = vld [vmem:[#allocation3 + $0x8] sm:$0xff]
    %v67 = vld [vmem:[#allocation6] sm:$0xff]
    %v68 = vld [vmem:[#allocation6 + $0x8] sm:$0xff]
    %v69 = vsub.f32 %v65, %v67
    %v70 = vsub.f32 %v66, %v68
    %v71 = vand.u32 2147483647, %v69
    %v72 = vand.u32 2147483647, %v70
    %v73 = vld [vmem:[#allocation2] sm:$0xff]
    %v74 = vadd.f32 %v71, %v72
    %v75 = vadd.f32 %v73, %v74
    %76 = vst [vmem:[#allocation2] sm:$0xff] %v75
    // Predicated region
    $region22: #{tpu_custom_call.1} parent=1 // pred_check
      %p77 = pneg %p60
    $region23: #{tpu_custom_call.1} parent=1 // pred_check_branch
      %79 = sbr.rel (%p77) target = $region25
    $region24: #{tpu_custom_call.1} parent=1 // pred_region
      %v80 = vld [vmem:[#allocation2] sm:$0xff]
      %v81 = vrot.slane %v80, 4
      %v82 = vadd.f32 %v80, %v81
      %v83 = vrot.slane %v82, 2
      %v84 = vadd.f32 %v82, %v83
      %v85 = vrot.slane %v84, 1
      %v86 = vadd.f32 %v84, %v85
      %87 = vst [vmem:[#allocation8] sm:$0x1] %v86
    $region25: #{tpu_custom_call.1} parent=1 // pred_fallthru
      _
    // Predicated region
    $region26: #{tpu_custom_call.1} parent=1 // pred_check
      _
    $region27: #{tpu_custom_call.1} parent=1 // pred_check_branch
      %89 = sbr.rel (0) target = $region29
    $region28: #{tpu_custom_call.1} parent=1 // pred_region
      %s91 = ssub.s32 16, 16
      %92 = vsyncadd [#allocation5], %s91
      %s94 = sshll.u32 [#allocation8], 4
      %s95 = int_to_ptr.vmem [resolvable:$true] %s94
      %97 = dma.vmem_to_hbm [thread:$0]  %s95, 16, %s2, [#allocation5]
    $region29: #{tpu_custom_call.1} parent=1 // pred_fallthru
      _
    // Predicated region
    $region30: #{tpu_custom_call.1} parent=1 // pred_check
      _
    $region31: #{tpu_custom_call.1} parent=1 // pred_check_branch
      %99 = sbr.rel (0) target = $region33
    $region32: #{tpu_custom_call.1} parent=1 // pred_region
      %100 = dma.done [#allocation5], 16
    $region33: #{tpu_custom_call.1} parent=1 // pred_fallthru
      _
    %101 = vsyncpa [#allocation4], 1
    %102 = vsyncpa [#allocation7], 1
    %103 = vsyncpa [#allocation5], 1

</llo_original>
